<compile_context>
chip_gen: v5e
topology: v5e:2x2
jax: 0.10.0
libtpu: 0.0.40
codegen_flags: <defaults>
</compile_context>

<pallas_src>
import re
import functools

import jax
import jax.numpy as jnp
from jax.experimental import pallas as pl
from jax.experimental.pallas import tpu as pltpu

LANE = 128
SUBLANE = 8


def _scale_bias_kernel(x_ref, w_ref, b_ref, o_ref):
    # x_ref/o_ref: (TB, TC); w_ref/b_ref: (1, TC) broadcast over the row axis.
    o_ref[...] = x_ref[...] * w_ref[...] + b_ref[...]


@functools.lru_cache(maxsize=1)
def _tpu_generation():
    """Best-effort TPU generation number (0 if unknown)."""
    try:
        kind = jax.devices()[0].device_kind
    except Exception:  # pragma: no cover - defensive
        return 0
    m = re.search(r"(\d+)", kind)
    return int(m.group(1)) if m else 0


def _block_target_bytes():
    # v6e / v7x: big HBM bandwidth -> larger tiles to amortize per-step cost.
    # v5e / older / unknown: stay small so the 16 MiB scoped-VMEM default holds.
    return (6 << 20) if _tpu_generation() >= 6 else (2 << 20)


def _pick_blocks(rows, cols, itemsize, target_bytes):
    """Pick (block_rows, block_cols) targeting ~target_bytes per block."""
    # dtype-aware sublane packing multiple: 8 f32 / 16 bf16 / 32 int8-fp8.
    sub = max(SUBLANE, 32 // max(1, itemsize))

    # Feature axis: tile only when it is a multiple of 128 and a single
    # sublane-row of it already exceeds the target (very wide F).
    if cols % LANE == 0 and sub * cols * itemsize > target_bytes:
        bc = max(LANE, (target_bytes // (sub * itemsize)) // LANE * LANE)
        bc = min(bc, cols)
    else:
        bc = cols  # full extent (required when cols is not a lane multiple)

    # Row axis: as many rows as fit the target.
    br = max(sub, target_bytes // max(1, bc * itemsize))
    br = min(br, rows)
    # Keep >= ~4 row tiles for large inputs so v7x's 2 TCs both get work.
    if rows >= 4 * sub:
        br = min(br, max(sub, (rows // 4) // sub * sub))
    if br < rows:
        br = max(sub, (br // sub) * sub)
    return br, bc


def _pallas_scale_bias_2d(x2d, w2d, b2d):
    """out[r, c] = x2d[r, c] * w2d[0, c] + b2d[0, c], tiled over rows/cols."""
    rows, cols = x2d.shape
    itemsize = jnp.dtype(x2d.dtype).itemsize
    target = _block_target_bytes()
    br, bc = _pick_blocks(rows, cols, itemsize, target)
    grid = (pl.cdiv(rows, br), pl.cdiv(cols, bc))

    # Scoped-VMEM budget: x/out double-buffered + tiny weight/bias buffers.
    needed = 4 * br * bc * itemsize + 4 * bc * itemsize + (1 << 20)
    cp_kwargs = dict(dimension_semantics=("parallel", "parallel"))
    if needed > (15 << 20):
        # Raise the scoped limit explicitly (still far under physical VMEM on
        # every generation, including v7x's 64 MiB).
        cp_kwargs["vmem_limit_bytes"] = int(min(needed + (4 << 20), 48 << 20))

    return pl.pallas_call(
        _scale_bias_kernel,
        out_shape=jax.ShapeDtypeStruct((rows, cols), x2d.dtype),
        grid=grid,
        in_specs=[
            pl.BlockSpec((br, bc), lambda i, j: (i, j)),
            pl.BlockSpec((1, bc), lambda i, j: (0, j)),  # weight: VMEM-resident
            pl.BlockSpec((1, bc), lambda i, j: (0, j)),  # bias:   VMEM-resident
        ],
        out_specs=pl.BlockSpec((br, bc), lambda i, j: (i, j)),
        compiler_params=pltpu.CompilerParams(**cp_kwargs),
        cost_estimate=pl.CostEstimate(
            flops=2 * rows * cols,
            transcendentals=0,
            bytes_accessed=(2 * rows * cols + 2 * cols) * itemsize,
        ),
    )(x2d, w2d, b2d)


def single_connection_forward(inputs, weight, bias):
    """out = inputs * weight + bias  (per-feature scale + offset).

    inputs: [B, F]; weight: [F]; bias: [F]. dtype is passed through (callers
    may feed bf16 on v6e/v7x to halve HBM traffic; this kernel is HBM-bound).
    """
    B, F = inputs.shape
    dtype = inputs.dtype
    w = weight.astype(dtype)
    b = bias.astype(dtype)

    if F % LANE != 0 and LANE % F == 0:
        # Small F (e.g. F=16): pack `rep` batch rows per 128-lane row so every
        # store is a full unmasked lane-dense vst. Only the aligned prefix is
        # packed (free contiguous reshape); the tiny tail (< rep rows) gets its
        # own call instead of padding/slicing the whole tensor.
        rep = LANE // F
        main = (B // rep) * rep
        pieces = []
        if main:
            w2 = jnp.tile(w, rep).reshape(1, LANE)
            b2 = jnp.tile(b, rep).reshape(1, LANE)
            xm = inputs if main == B else inputs[:main]
            xm = xm.reshape(main // rep, LANE)  # contiguous -> free reshape
            om = _pallas_scale_bias_2d(xm, w2, b2).reshape(main, F)
            pieces.append(om)
        if main < B:
            ot = _pallas_scale_bias_2d(inputs[main:], w.reshape(1, F),
                                       b.reshape(1, F))
            pieces.append(ot)
        return pieces[0] if len(pieces) == 1 else jnp.concatenate(pieces, 0)

    # F a multiple of 128: already lane-dense, tile batch (and F if huge).
    # General fallback (F neither multiple nor divisor of 128): full feature
    # extent per block; stores on the last partial lane-tile are masked but
    # correct.
    return _pallas_scale_bias_2d(inputs, w.reshape(1, F), b.reshape(1, F))


if __name__ == "__main__":
    key = jax.random.PRNGKey(0)
    k_x, k_b, k_x2, k_x3, k_x4, k_b4 = jax.random.split(key, 6)

    # Shapes implied by the module docstring: inputs [batch_size, 16].
    batch_size = 8
    input_size = 16

    # weight init mirrors nn.Parameter(torch.ones(input_size)); bias is
    # uninitialized in the module, so use a deterministic random init here.
    weight = jnp.ones((input_size,), dtype=jnp.float32)
    bias = jax.random.normal(k_b, (input_size,), dtype=jnp.float32)
    x = jax.random.normal(k_x, (batch_size, input_size), dtype=jnp.float32)

    out = jax.block_until_ready(single_connection_forward(x, weight, bias))
    ref = x * weight[None, :] + bias[None, :]
    assert out.shape == (batch_size, input_size)
    assert jnp.allclose(out, ref, atol=1e-6, rtol=1e-6)

    # Lane-dense direct path (F multiple of 128), batch tiled over the grid.
    x2 = jax.random.normal(k_x2, (64, 128), dtype=jnp.float32)
    w2 = jnp.linspace(0.5, 1.5, 128, dtype=jnp.float32)
    b2 = jnp.linspace(-1.0, 1.0, 128, dtype=jnp.float32)
    out2 = jax.block_until_ready(single_connection_forward(x2, w2, b2))
    assert jnp.allclose(out2, x2 * w2[None, :] + b2[None, :], atol=1e-6, rtol=1e-6)

    # Packed path with a non-divisible batch (exercises main + tail split).
    x3 = jax.random.normal(k_x3, (11, input_size), dtype=jnp.float32)
    out3 = jax.block_until_ready(single_connection_forward(x3, weight, bias))
    assert jnp.allclose(out3, x3 * weight[None, :] + bias[None, :],
                        atol=1e-6, rtol=1e-6)

    # General fallback (F neither multiple nor divisor of 128).
    x4 = jax.random.normal(k_x4, (8, 48), dtype=jnp.float32)
    w4 = jnp.linspace(0.9, 1.1, 48, dtype=jnp.float32)
    b4 = jax.random.normal(k_b4, (48,), dtype=jnp.float32)
    out4 = jax.block_until_ready(single_connection_forward(x4, w4, b4))
    assert jnp.allclose(out4, x4 * w4[None, :] + b4[None, :], atol=1e-6, rtol=1e-6)

    print("KERNEL_OK")
</pallas_src>

<mosaic_0001>
module attributes {stable_mosaic.version = 11 : i64} {
  func.func @_scale_bias_kernel(%arg0: i32, %arg1: i32, %arg2: memref<1x128xf32, #tpu.memory_space<vmem>>, %arg3: memref<1x128xf32, #tpu.memory_space<vmem>>, %arg4: memref<1x128xf32, #tpu.memory_space<vmem>>, %arg5: memref<1x128xf32, #tpu.memory_space<vmem>>) attributes {dimension_semantics = [#tpu.dimension_semantics<parallel>, #tpu.dimension_semantics<parallel>], iteration_bounds = array<i64: 1, 1>, scalar_prefetch = 0 : i64, scratch_operands = 0 : i64, tpu.core_type = #tpu.core_type<tc>, window_params = [{transform_indices = @transform_0, window_bounds = array<i64: 1, 128>}, {transform_indices = @transform_1, window_bounds = array<i64: 1, 128>}, {transform_indices = @transform_2, window_bounds = array<i64: 1, 128>}, {transform_indices = @transform_3, window_bounds = array<i64: 1, 128>}]} {
    %c0 = arith.constant 0 : index
    %c0_0 = arith.constant 0 : index
    %0 = vector.load %arg2[%c0, %c0_0] : memref<1x128xf32, #tpu.memory_space<vmem>>, vector<1x128xf32>
    %c0_1 = arith.constant 0 : index
    %c0_2 = arith.constant 0 : index
    %1 = vector.load %arg3[%c0_1, %c0_2] : memref<1x128xf32, #tpu.memory_space<vmem>>, vector<1x128xf32>
    %2 = arith.mulf %0, %1 : vector<1x128xf32>
    %c0_3 = arith.constant 0 : index
    %c0_4 = arith.constant 0 : index
    %3 = vector.load %arg4[%c0_3, %c0_4] : memref<1x128xf32, #tpu.memory_space<vmem>>, vector<1x128xf32>
    %4 = arith.addf %2, %3 : vector<1x128xf32>
    %c0_5 = arith.constant 0 : index
    %c0_6 = arith.constant 0 : index
    %5 = vector.load %arg5[%c0_5, %c0_6] : memref<1x128xf32, #tpu.memory_space<vmem>>, vector<1x128xf32>
    tpu.vector_store %arg5[%c0_5, %c0_6], %4 {strides = array<i32>} : memref<1x128xf32, #tpu.memory_space<vmem>>, vector<1x128xf32>,
    return
  }
  func.func @transform_0(%arg0: i32, %arg1: i32) -> (i32, i32) {
    %c0_i32 = arith.constant 0 : i32
    return %arg0, %arg1 : i32, i32
  }
  func.func @transform_1(%arg0: i32, %arg1: i32) -> (i32, i32) {
    %c0_i32 = arith.constant 0 : i32
    %c0_i32_0 = arith.constant 0 : i32
    return %c0_i32, %arg1 : i32, i32
  }
  func.func @transform_2(%arg0: i32, %arg1: i32) -> (i32, i32) {
    %c0_i32 = arith.constant 0 : i32
    %c0_i32_0 = arith.constant 0 : i32
    return %c0_i32, %arg1 : i32, i32
  }
  func.func @transform_3(%arg0: i32, %arg1: i32) -> (i32, i32) {
    %c0_i32 = arith.constant 0 : i32
    return %arg0, %arg1 : i32, i32
  }
}

</mosaic_0001>

<llo_original>
// kernel: tpu_custom_call.1
$region0: #{tpu_custom_call.1}
  #allocation0 [shape = 'u32[]', space=smem, size = 0x4, offset = 0x4, fixed_abs, tag = 'smem constant byte address 0x4 - core index']
  #allocation1 [shape = 'u32[72,128]{1,0:T(1,128)}', space=vmem, size = 0x9000, scoped, tag = 'internal scratch']
  %s0 = inlined_call_operand.hbm [shape: f32[1,128], index: 0, kind: input, shape index: {}]
  %s1 = inlined_call_operand.hbm [shape: f32[1,128], index: 1, kind: input, shape index: {}]
  %s2 = inlined_call_operand.vmem [shape: f32[1,128], index: 2, kind: input, shape index: {}]
  %s3 = inlined_call_operand.hbm [shape: f32[1,128], index: 3, kind: output, shape index: {}]
  %s4 = sld [smem:[#allocation0]]
  $region30: #{tpu_custom_call.1} parent=0
    _
  %s6 = ssub.s32 1, %s4
  %s7 = scalar_select 0, %s6, %s4
  $region1: #{tpu_custom_call.1} parent=0
    #allocation2 [shape = 'u8[512]{0}', space=vmem, size = 0x400, scoped, tag = 'input window, operand 0, single buffered']
    #allocation3 [shape = 's32[1]{0}', space=sflag, size = 0x4, scoped, tag = 'scoped memory for tpu_custom_call.1']
    #allocation4 [shape = 's32[1]{0}', space=sflag, size = 0x4, scoped, tag = 'scoped memory for tpu_custom_call.1']
    #allocation5 [shape = 'u8[512]{0}', space=vmem, size = 0x400, scoped, tag = 'input window, operand 1, single buffered']
    #allocation6 [shape = 's32[1]{0}', space=sflag, size = 0x4, scoped, tag = 'scoped memory for tpu_custom_call.1']
    #allocation7 [shape = 'u8[512]{0}', space=vmem, size = 0x400, scoped, tag = 'output window, operand 0, single buffered']
    %8 = vsyncpa [#allocation3], 0
    %9 = vsyncpa [#allocation6], 0
    %10 = vsyncpa [#allocation4], 0
    // Predicated region
    $region2: #{tpu_custom_call.1} parent=1 // pred_check
      _
    $region3: #{tpu_custom_call.1} parent=1 // pred_check_branch
      %12 = sbr.rel (0) target = $region5
    $region4: #{tpu_custom_call.1} parent=1 // pred_region
      %14 = vsyncadd [#allocation3], 0
      %s16 = sshll.u32 %s0, 4
      %s17 = int_to_ptr.hbm [resolvable:$true] %s16
      %s18 = sshll.u32 [#allocation2], 4
      %s19 = int_to_ptr.vmem [resolvable:$true] %s18
      %21 = dma.hbm_to_vmem [thread:$0]  %s17, 16, %s19, [#allocation3]
    $region5: #{tpu_custom_call.1} parent=1 // pred_fallthru
      _
    // Predicated region
    $region6: #{tpu_custom_call.1} parent=1 // pred_check
      _
    $region7: #{tpu_custom_call.1} parent=1 // pred_check_branch
      %23 = sbr.rel (0) target = $region9
    $region8: #{tpu_custom_call.1} parent=1 // pred_region
      %25 = vsyncadd [#allocation6], 0
      %s27 = sshll.u32 %s1, 4
      %s28 = int_to_ptr.hbm [resolvable:$true] %s27
      %s29 = sshll.u32 [#allocation5], 4
      %s30 = int_to_ptr.vmem [resolvable:$true] %s29
      %32 = dma.hbm_to_vmem [thread:$0]  %s28, 16, %s30, [#allocation6]
    $region9: #{tpu_custom_call.1} parent=1 // pred_fallthru
      _
    // Predicated region
    $region10: #{tpu_custom_call.1} parent=1 // pred_check
      _
    $region11: #{tpu_custom_call.1} parent=1 // pred_check_branch
      %34 = sbr.rel (0) target = $region13
    $region12: #{tpu_custom_call.1} parent=1 // pred_region
      _
    $region13: #{tpu_custom_call.1} parent=1 // pred_fallthru
      _
    // Predicated region
    $region14: #{tpu_custom_call.1} parent=1 // pred_check
      _
    $region15: #{tpu_custom_call.1} parent=1 // pred_check_branch
      %36 = sbr.rel (0) target = $region17
    $region16: #{tpu_custom_call.1} parent=1 // pred_region
      %38 = dma.done [#allocation3], 16
    $region17: #{tpu_custom_call.1} parent=1 // pred_fallthru
      _
    // Predicated region
    $region18: #{tpu_custom_call.1} parent=1 // pred_check
      _
    $region19: #{tpu_custom_call.1} parent=1 // pred_check_branch
      %40 = sbr.rel (0) target = $region21
    $region20: #{tpu_custom_call.1} parent=1 // pred_region
      %42 = dma.done [#allocation6], 16
    $region21: #{tpu_custom_call.1} parent=1 // pred_fallthru
      _
    %v43 = vld [vmem:[#allocation2] sm:$0x1]
    %v44 = vld [vmem:[#allocation5] sm:$0x1]
    %v45 = vmul.f32 %v43, %v44
    %v46 = vld [vmem:[%s2] sm:$0x1]
    %v47 = vadd.f32 %v45, %v46
    %48 = vst [vmem:[#allocation7] sm:$0x1] %v47
    // Predicated region
    $region22: #{tpu_custom_call.1} parent=1 // pred_check
      _
    $region23: #{tpu_custom_call.1} parent=1 // pred_check_branch
      %50 = sbr.rel (0) target = $region25
    $region24: #{tpu_custom_call.1} parent=1 // pred_region
      %52 = vsyncadd [#allocation4], 0
      %s54 = sshll.u32 [#allocation7], 4
      %s55 = int_to_ptr.vmem [resolvable:$true] %s54
      %s56 = sshll.u32 %s3, 4
      %s57 = int_to_ptr.hbm [resolvable:$true] %s56
      %59 = dma.vmem_to_hbm [thread:$0]  %s55, 16, %s57, [#allocation4]
    $region25: #{tpu_custom_call.1} parent=1 // pred_fallthru
      _
    // Predicated region
    $region26: #{tpu_custom_call.1} parent=1 // pred_check
      _
    $region27: #{tpu_custom_call.1} parent=1 // pred_check_branch
      %61 = sbr.rel (0) target = $region29
    $region28: #{tpu_custom_call.1} parent=1 // pred_region
      %63 = dma.done [#allocation4], 16
    $region29: #{tpu_custom_call.1} parent=1 // pred_fallthru
      _
    %64 = vsyncpa [#allocation3], 1
    %65 = vsyncpa [#allocation6], 1
    %66 = vsyncpa [#allocation4], 1

</llo_original>
